<compile_context>
chip_gen: v6e
topology: v6e:2x2x1
jax: 0.10.0
libtpu: 0.0.40
codegen_flags: <defaults>
</compile_context>

<pallas_src>
import numpy as np
import jax
import jax.numpy as jnp
from jax.experimental import pallas as pl
from jax.experimental.pallas import tpu as pltpu


def cbam_kernel(x_ref, w1t_ref, w2t_ref, msp_ref, o_ref):
    Nb, C, HW = x_ref.shape
    x = x_ref[...]                                                 # (Nb, C, HW) caller dtype
    # Per-element intermediates keep the caller dtype on bf16 inputs (halves
    # VMEM + VPU traffic on v6e/v7x); f32 otherwise.  All reductions and the
    # attention logits accumulate in f32.
    cdt = jnp.bfloat16 if x_ref.dtype == jnp.bfloat16 else jnp.float32

    # ---------------- Channel attention ----------------
    avg = jnp.sum(x, axis=2, dtype=jnp.float32) * (1.0 / HW)       # (Nb, C)
    mx = jnp.max(x, axis=2).astype(jnp.float32)                    # (Nb, C)

    # Fused avg/max branches: one dot -> relu -> dot over stacked rows.
    pooled = jnp.concatenate([avg, mx], axis=0).astype(jnp.bfloat16)    # (2*Nb, C)
    h = jnp.maximum(
        jnp.dot(pooled, w1t_ref[...], preferred_element_type=jnp.float32), 0.0)
    z = jnp.dot(h.astype(jnp.bfloat16), w2t_ref[...],
                preferred_element_type=jnp.float32)                # (2*Nb, C)
    ca = jax.nn.sigmoid(z[:Nb] + z[Nb:])                           # (Nb, C) f32

    out1 = x.astype(cdt) * ca.astype(cdt)[:, :, None]              # (Nb, C, HW)

    # ---------------- Spatial attention ----------------
    sp_avg = jnp.sum(out1, axis=1, dtype=jnp.float32) * (1.0 / C)  # (Nb, HW)
    sp_max = jnp.max(out1, axis=1).astype(jnp.float32)             # (Nb, HW)
    # Exact 7x7 zero-padded conv over (avg, max) == ONE Toeplitz matmul.
    sp = jnp.concatenate([sp_avg, sp_max], axis=1).astype(jnp.bfloat16)  # (Nb, 2*HW)
    logit = jnp.dot(sp, msp_ref[...], preferred_element_type=jnp.float32)
    sa = jax.nn.sigmoid(logit)                                     # (Nb, HW) f32

    o_ref[...] = (out1 * sa.astype(cdt)[:, None, :]).astype(o_ref.dtype)


def _conv_to_matmul_weights(wsp, H, W):
    """Expand Conv2d(2, 1, K, padding=K//2, bias=False) weights into a single
    stacked (2*H*W, H*W) matrix M such that
        out_flat = concat([avg_flat, max_flat], -1) @ M
    is exactly the zero-padded cross-correlation.  Index pattern is static
    numpy; only the weight scatter is traced, so this works under jit."""
    K = wsp.shape[-1]
    p = K // 2
    HW = H * W
    rows, cols, taps = [], [], []
    for y in range(H):
        for x in range(W):
            o = y * W + x
            for dy in range(K):
                yy = y + dy - p
                if yy < 0 or yy >= H:
                    continue
                for dx in range(K):
                    xx = x + dx - p
                    if xx < 0 or xx >= W:
                        continue
                    rows.append(yy * W + xx)
                    cols.append(o)
                    taps.append(dy * K + dx)
    rows = np.asarray(rows, np.int32)
    cols = np.asarray(cols, np.int32)
    taps = np.asarray(taps, np.int32)
    w_flat = jnp.asarray(wsp, jnp.float32).reshape(2, K * K)       # (2, K*K)
    m = jnp.zeros((2 * HW, HW), jnp.float32)
    m = m.at[rows, cols].set(w_flat[0, taps])                      # avg channel
    m = m.at[rows + HW, cols].set(w_flat[1, taps])                 # max channel
    return m


def cbam(x, w1, w2, wsp, *, kernel_size=7):
    """x: (N, C, H, W) (f32 or bf16); w1: (C//r, C); w2: (C, C//r);
    wsp: (1, 2, K, K).  Output has the same dtype as x."""
    N, C, H, W = x.shape
    Cr = w1.shape[0]
    HW = H * W
    del kernel_size  # K is taken from wsp

    # TODO(synk): for large H*W the (2*HW, HW) Toeplitz matrix gets big; a
    # shift/roll-based conv path would be needed there.
    assert 2 * HW * HW * 2 <= 8 * 1024 * 1024, "spatial map too large for Toeplitz conv path"

    x_flat = x.reshape(N, C, HW)                                   # free: NCHW contiguous
    msp = _conv_to_matmul_weights(wsp, H, W).astype(jnp.bfloat16)  # (2*HW, HW)
    w1t = jnp.asarray(w1, jnp.float32).T.astype(jnp.bfloat16)      # (C, Cr)
    w2t = jnp.asarray(w2, jnp.float32).T.astype(jnp.bfloat16)      # (Cr, C)

    # ----- images per grid step: ~2 MiB input blocks, >=4 steps when N allows,
    #       prefer an even step count (v7x shards the parallel axis on 2 TCs).
    in_bytes = int(jnp.dtype(x.dtype).itemsize)
    cdt_bytes = 2 if x.dtype == jnp.bfloat16 else 4
    per_img = C * HW * in_bytes
    target_blk = 2 * 1024 * 1024
    cap = max(1, min(N, target_blk // max(per_img, 1)))
    if N >= 4:
        cap = min(cap, max(1, N // 4))
    elif N >= 2:
        cap = min(cap, max(1, N // 2))
    nb = cap
    for cand in range(cap, 0, -1):                                 # largest nb with even #steps
        if pl.cdiv(N, cand) % 2 == 0:
            nb = cand
            break
    steps = pl.cdiv(N, nb)

    # Ragged last block: zero-pad the batch instead of shrinking nb to 1.
    Np = steps * nb
    if Np != N:
        x_flat = jnp.pad(x_flat, ((0, Np - N), (0, 0), (0, 0)))

    # VMEM plan derived from the same accounting as nb (v7x-safe: 64 MiB phys).
    blk = nb * C * HW
    w_bytes = (C * Cr + Cr * C + 2 * HW * HW) * 2                  # bf16 constants
    vmem_need = (2 * blk * in_bytes                                # input, double-buffered
                 + 2 * blk * in_bytes                              # output, double-buffered
                 + 4 * blk * cdt_bytes                             # live block intermediates
                 + 2 * w_bytes                                     # constant specs (dbl-buffered)
                 + 4 * 1024 * 1024)                                # Mosaic scratch headroom
    vmem_limit = int(min(max(vmem_need, 16 * 1024 * 1024), 60 * 1024 * 1024))

    out_flat = pl.pallas_call(
        cbam_kernel,
        out_shape=jax.ShapeDtypeStruct((Np, C, HW), x.dtype),
        grid=(steps,),
        in_specs=[
            pl.BlockSpec((nb, C, HW), lambda n: (n, 0, 0)),
            pl.BlockSpec((C, Cr), lambda n: (0, 0)),
            pl.BlockSpec((Cr, C), lambda n: (0, 0)),
            pl.BlockSpec((2 * HW, HW), lambda n: (0, 0)),
        ],
        out_specs=pl.BlockSpec((nb, C, HW), lambda n: (n, 0, 0)),
        compiler_params=pltpu.CompilerParams(
            dimension_semantics=("parallel",),
            vmem_limit_bytes=vmem_limit),
    )(x_flat, w1t, w2t, msp)
    return out_flat[:N].reshape(N, C, H, W)


def cbam_ref(x, w1, w2, wsp):
    """Pure-JAX f32 reference matching the PyTorch module semantics."""
    x = x.astype(jnp.float32)
    avg = jnp.mean(x, axis=(2, 3), keepdims=True)                  # (N,C,1,1)
    mx = jnp.max(x, axis=(2, 3), keepdims=True)

    def mlp(v):
        h = jnp.einsum('rc,ncij->nrij', w1, v)
        h = jnp.maximum(h, 0.0)
        return jnp.einsum('cr,nrij->ncij', w2, h)

    ca = jax.nn.sigmoid(mlp(avg) + mlp(mx))
    out1 = ca * x

    sp_avg = jnp.mean(out1, axis=1, keepdims=True)
    sp_max = jnp.max(out1, axis=1, keepdims=True)
    sp = jnp.concatenate([sp_avg, sp_max], axis=1)                 # (N,2,H,W)
    pad = wsp.shape[-1] // 2
    sa = jax.lax.conv_general_dilated(
        sp, wsp, window_strides=(1, 1),
        padding=[(pad, pad), (pad, pad)],
        dimension_numbers=('NCHW', 'OIHW', 'NCHW'))
    sa = jax.nn.sigmoid(sa)
    return sa * out1


if __name__ == "__main__":
    # Small shapes consistent with CBAM(c1=32, ratio=16, kernel_size=7).
    N, C, H, W = 2, 32, 16, 16
    ratio, ksize = 16, 7
    Cr = C // ratio

    key = jax.random.PRNGKey(0)
    kx, k1, k2, k3 = jax.random.split(key, 4)
    x = jax.random.normal(kx, (N, C, H, W), dtype=jnp.float32)
    w1 = 0.1 * jax.random.normal(k1, (Cr, C), dtype=jnp.float32)          # f1 (1x1, no bias)
    w2 = 0.1 * jax.random.normal(k2, (C, Cr), dtype=jnp.float32)          # f2 (1x1, no bias)
    wsp = 0.1 * jax.random.normal(k3, (1, 2, ksize, ksize), jnp.float32)  # spatial 7x7 conv

    # f32 HBM I/O path (bf16 MXU operands, f32 accumulation / elementwise).
    out = jax.block_until_ready(cbam(x, w1, w2, wsp, kernel_size=ksize))
    ref = cbam_ref(x, w1, w2, wsp)
    assert out.shape == (N, C, H, W)
    assert jnp.allclose(out, ref, rtol=1e-2, atol=1e-2), "kernel/ref mismatch (f32)"

    # bf16 HBM I/O path (half the DMA traffic; bf16 elementwise intermediates,
    # f32 reductions / logits).
    x_bf16 = x.astype(jnp.bfloat16)
    out_bf = jax.block_until_ready(cbam(x_bf16, w1, w2, wsp, kernel_size=ksize))
    ref_bf = cbam_ref(x_bf16.astype(jnp.float32), w1, w2, wsp)
    assert out_bf.dtype == jnp.bfloat16
    assert jnp.allclose(out_bf.astype(jnp.float32), ref_bf, rtol=3e-2, atol=3e-2), \
        "kernel/ref mismatch (bf16)"

    print("KERNEL_OK")
</pallas_src>

<mosaic_0001>
module attributes {stable_mosaic.version = 11 : i64} {
  func.func @cbam_kernel(%arg0: i32, %arg1: memref<1x32x256xf32, #tpu.memory_space<vmem>>, %arg2: memref<32x2xbf16, #tpu.memory_space<vmem>>, %arg3: memref<2x32xbf16, #tpu.memory_space<vmem>>, %arg4: memref<512x256xbf16, #tpu.memory_space<vmem>>, %arg5: memref<1x32x256xf32, #tpu.memory_space<vmem>>) attributes {dimension_semantics = [#tpu.dimension_semantics<parallel>], iteration_bounds = array<i64: 2>, scalar_prefetch = 0 : i64, scratch_operands = 0 : i64, tpu.core_type = #tpu.core_type<tc>, window_params = [{transform_indices = @transform_0, window_bounds = array<i64: 1, 32, 256>}, {pipeline_mode = #tpu.pipeline_mode<synchronous>, transform_indices = @transform_1, window_bounds = array<i64: 32, 2>}, {pipeline_mode = #tpu.pipeline_mode<synchronous>, transform_indices = @transform_2, window_bounds = array<i64: 2, 32>}, {pipeline_mode = #tpu.pipeline_mode<synchronous>, transform_indices = @transform_3, window_bounds = array<i64: 512, 256>}, {transform_indices = @transform_4, window_bounds = array<i64: 1, 32, 256>}]} {
    %c0 = arith.constant 0 : index
    %c0_0 = arith.constant 0 : index
    %c0_1 = arith.constant 0 : index
    %0 = vector.load %arg1[%c0, %c0_0, %c0_1] : memref<1x32x256xf32, #tpu.memory_space<vmem>>, vector<1x32x256xf32>
    %cst = arith.constant dense<0.000000e+00> : vector<1x32xf32>
    %1 = vector.multi_reduction <add>, %0, %cst [2] : vector<1x32x256xf32> to vector<1x32xf32>
    %cst_2 = arith.constant 3.906250e-03 : f32
    %2 = vector.broadcast %cst_2 : f32 to vector<1x32xf32>
    %3 = arith.mulf %1, %2 : vector<1x32xf32>
    %cst_3 = arith.constant dense<0xFF800000> : vector<1x32xf32>
    %4 = vector.multi_reduction <maximumf>, %0, %cst_3 [2] : vector<1x32x256xf32> to vector<1x32xf32>
    %5 = tpu.concatenate %3, %4 in 0 : vector<1x32xf32>, vector<1x32xf32> -> vector<2x32xf32>
    %6 = arith.truncf %5 : vector<2x32xf32> to vector<2x32xbf16>
    %c0_4 = arith.constant 0 : index
    %c0_5 = arith.constant 0 : index
    %7 = vector.load %arg2[%c0_4, %c0_5] : memref<32x2xbf16, #tpu.memory_space<vmem>>, vector<32x2xbf16>
    %cst_6 = arith.constant dense<0.000000e+00> : vector<2x2xf32>
    %8 = tpu.matmul %6, %7, %cst_6 {dimension_numbers = #tpu.dot_dimension_numbers<[1], [0], [0], [1], [0, 0, 1, 1], [], []>} : vector<2x32xbf16>, vector<32x2xbf16>, vector<2x2xf32> -> vector<2x2xf32>
    %cst_7 = arith.constant 0.000000e+00 : f32
    %9 = vector.broadcast %cst_7 : f32 to vector<2x2xf32>
    %10 = arith.maximumf %8, %9 : vector<2x2xf32>
    %11 = arith.truncf %10 : vector<2x2xf32> to vector<2x2xbf16>
    %c0_8 = arith.constant 0 : index
    %c0_9 = arith.constant 0 : index
    %12 = vector.load %arg3[%c0_8, %c0_9] : memref<2x32xbf16, #tpu.memory_space<vmem>>, vector<2x32xbf16>
    %cst_10 = arith.constant dense<0.000000e+00> : vector<2x32xf32>
    %13 = tpu.matmul %11, %12, %cst_10 {dimension_numbers = #tpu.dot_dimension_numbers<[1], [0], [0], [1], [0, 0, 1, 1], [], []>} : vector<2x2xbf16>, vector<2x32xbf16>, vector<2x32xf32> -> vector<2x32xf32>
    %14 = vector.extract_strided_slice %13 {offsets = [0, 0], sizes = [1, 32], strides = [1, 1]} : vector<2x32xf32> to vector<1x32xf32>
    %15 = vector.extract_strided_slice %13 {offsets = [1, 0], sizes = [1, 32], strides = [1, 1]} : vector<2x32xf32> to vector<1x32xf32>
    %16 = arith.addf %14, %15 : vector<1x32xf32>
    %17 = arith.negf %16 : vector<1x32xf32>
    %18 = math.exp %17 : vector<1x32xf32>
    %cst_11 = arith.constant 1.000000e+00 : f32
    %19 = vector.broadcast %cst_11 : f32 to vector<1x32xf32>
    %20 = arith.addf %19, %18 : vector<1x32xf32>
    %21 = arith.divf %19, %20 : vector<1x32xf32>
    %22 = vector.shape_cast %21 : vector<1x32xf32> to vector<1x32x1xf32>
    %23 = vector.broadcast %22 : vector<1x32x1xf32> to vector<1x32x256xf32>
    %24 = arith.mulf %0, %23 : vector<1x32x256xf32>
    %cst_12 = arith.constant dense<0.000000e+00> : vector<1x256xf32>
    %25 = vector.multi_reduction <add>, %24, %cst_12 [1] : vector<1x32x256xf32> to vector<1x256xf32>
    %cst_13 = arith.constant 3.125000e-02 : f32
    %26 = vector.broadcast %cst_13 : f32 to vector<1x256xf32>
    %27 = arith.mulf %25, %26 : vector<1x256xf32>
    %cst_14 = arith.constant dense<0xFF800000> : vector<1x256xf32>
    %28 = vector.multi_reduction <maximumf>, %24, %cst_14 [1] : vector<1x32x256xf32> to vector<1x256xf32>
    %29 = tpu.concatenate %27, %28 in 1 : vector<1x256xf32>, vector<1x256xf32> -> vector<1x512xf32>
    %30 = arith.truncf %29 : vector<1x512xf32> to vector<1x512xbf16>
    %c0_15 = arith.constant 0 : index
    %c0_16 = arith.constant 0 : index
    %31 = vector.load %arg4[%c0_15, %c0_16] : memref<512x256xbf16, #tpu.memory_space<vmem>>, vector<512x256xbf16>
    %cst_17 = arith.constant dense<0.000000e+00> : vector<1x256xf32>
    %32 = tpu.matmul %30, %31, %cst_17 {dimension_numbers = #tpu.dot_dimension_numbers<[1], [0], [0], [1], [0, 0, 1, 1], [], []>} : vector<1x512xbf16>, vector<512x256xbf16>, vector<1x256xf32> -> vector<1x256xf32>
    %33 = arith.negf %32 : vector<1x256xf32>
    %34 = math.exp %33 : vector<1x256xf32>
    %cst_18 = arith.constant 1.000000e+00 : f32
    %35 = vector.broadcast %cst_18 : f32 to vector<1x256xf32>
    %36 = arith.addf %35, %34 : vector<1x256xf32>
    %37 = arith.divf %35, %36 : vector<1x256xf32>
    %38 = vector.shape_cast %37 : vector<1x256xf32> to vector<1x1x256xf32>
    %39 = vector.broadcast %38 : vector<1x1x256xf32> to vector<1x32x256xf32>
    %40 = arith.mulf %24, %39 : vector<1x32x256xf32>
    %c0_19 = arith.constant 0 : index
    %c0_20 = arith.constant 0 : index
    %c0_21 = arith.constant 0 : index
    %41 = vector.load %arg5[%c0_19, %c0_20, %c0_21] : memref<1x32x256xf32, #tpu.memory_space<vmem>>, vector<1x32x256xf32>
    tpu.vector_store %arg5[%c0_19, %c0_20, %c0_21], %40 {strides = array<i32>} : memref<1x32x256xf32, #tpu.memory_space<vmem>>, vector<1x32x256xf32>,
    return
  }
  func.func @transform_0(%arg0: i32) -> (i32, i32, i32) {
    %c0_i32 = arith.constant 0 : i32
    %c0_i32_0 = arith.constant 0 : i32
    %c0_i32_1 = arith.constant 0 : i32
    return %arg0, %c0_i32, %c0_i32_0 : i32, i32, i32
  }
  func.func @transform_1(%arg0: i32) -> (i32, i32) {
    %c0_i32 = arith.constant 0 : i32
    %c0_i32_0 = arith.constant 0 : i32
    %c0_i32_1 = arith.constant 0 : i32
    return %c0_i32, %c0_i32_0 : i32, i32
  }
  func.func @transform_2(%arg0: i32) -> (i32, i32) {
    %c0_i32 = arith.constant 0 : i32
    %c0_i32_0 = arith.constant 0 : i32
    %c0_i32_1 = arith.constant 0 : i32
    return %c0_i32, %c0_i32_0 : i32, i32
  }
  func.func @transform_3(%arg0: i32) -> (i32, i32) {
    %c0_i32 = arith.constant 0 : i32
    %c0_i32_0 = arith.constant 0 : i32
    %c0_i32_1 = arith.constant 0 : i32
    return %c0_i32, %c0_i32_0 : i32, i32
  }
  func.func @transform_4(%arg0: i32) -> (i32, i32, i32) {
    %c0_i32 = arith.constant 0 : i32
    %c0_i32_0 = arith.constant 0 : i32
    %c0_i32_1 = arith.constant 0 : i32
    return %arg0, %c0_i32, %c0_i32_0 : i32, i32, i32
  }
}

</mosaic_0001>

<llo_original>
// kernel: tpu_custom_call.1
$region0: #{tpu_custom_call.1}
  #allocation0 [shape = 'u32[]', space=smem, size = 0x4, offset = 0x4, fixed_abs, tag = 'smem constant byte address 0x4 - core index']
  #allocation1 [shape = 'u32[144,128]{1,0:T(1,128)}', space=vmem, size = 0x12000, scoped, tag = 'internal scratch']
  %s0 = inlined_call_operand.hbm [shape: f32[2,32,256], index: 0, kind: input, shape index: {}]
  %s1 = inlined_call_operand.vmem [shape: bf16[32,2], index: 1, kind: input, shape index: {}]
  %s2 = inlined_call_operand.vmem [shape: bf16[2,32], index: 2, kind: input, shape index: {}]
  %s3 = inlined_call_operand.hbm [shape: bf16[512,256], index: 3, kind: input, shape index: {}]
  %s4 = inlined_call_operand.hbm [shape: f32[2,32,256], index: 4, kind: output, shape index: {}]
  %s5 = sld [smem:[#allocation0]]
  $region57: #{tpu_custom_call.1} parent=0
    _
  %s7 = ssub.s32 1, %s5
  %s8 = scalar_select 0, %s7, %s5
  $region1: #{tpu_custom_call.1} parent=0
    #allocation2 [shape = 'u8[65536]{0}', space=vmem, size = 0x10000, scoped, tag = 'input window, operand 0']
    #allocation3 [shape = 's32[2]{0}', space=sflag, size = 0x8, scoped, tag = 'scoped memory for tpu_custom_call.1']
    #allocation4 [shape = 's32[2]{0}', space=sflag, size = 0x8, scoped, tag = 'scoped memory for tpu_custom_call.1']
    #allocation5 [shape = 'u8[262144]{0}', space=vmem, size = 0x40000, scoped, tag = 'input window, operand 3, single buffered']
    #allocation6 [shape = 's32[1]{0}', space=sflag, size = 0x4, scoped, tag = 'scoped memory for tpu_custom_call.1']
    #allocation7 [shape = 'u8[65536]{0}', space=vmem, size = 0x10000, scoped, tag = 'output window, operand 0']
    %9 = vsyncpa [#allocation3], 0
    %s10 = scalar_lea.sflag [#allocation3], 1
    %11 = vsyncpa %s10, 0
    %12 = vsyncpa [#allocation6], 0
    %13 = vsyncpa [#allocation4], 0
    %s14 = scalar_lea.sflag [#allocation4], 1
    %15 = vsyncpa %s14, 0
    loop: start=0, step=1, limit=4
    $region2: #{tpu_custom_call.1} parent=1 // loop_pre_header
      _
    $region3: #{tpu_custom_call.1} parent=1 // loop_header
      %s17 = sphi 0, %s21
      %p18 = scmp.ge.s32.totalorder %s17, 4
      %s27 = sphi 0, %s29
      %s30 = sphi 0, %s27
      %s31 = sphi 0, %s30
      %s47 = sphi 0, %s31
      %s51 = sphi 0, %s51
      %s53 = sphi 0, %s51
      %s54 = sphi 0, %s53
      %s68 = sphi 0, %s54
      %s72 = sphi 0, %s72
      %s74 = sphi 0, %s72
      %s75 = sphi 0, %s74
      %s89 = sphi 0, %s75
      %s93 = sphi 0, %s93
      %s95 = sphi 0, %s93
      %s96 = sphi 0, %s95
      %s110 = sphi 0, %s96
      %s116 = sphi 0, %s118
      %s119 = sphi 0, %s116
      %s120 = sphi 0, %s119
      %s136 = sphi 0, %s120
    $region4: #{tpu_custom_call.1} parent=1 // loop_header_branch
      %20 = sbr.rel (%p18) target = $region8
    $region5: #{tpu_custom_call.1} parent=1 // loop_body
      %s22 = ssub.s32 %s17, 1
      %s23 = ssub.s32 %s17, 2
      %s24 = sadd.s32 %s17, 1
      %s25 = ssub.s32 %s17, %s24
      %p26 = scmp.eq.s32.totalorder %s25, 0
      %s28 = sadd.s32 %s27, 1
      %s29 = scalar_select %p26, %s27, %s28
      %p32 = pneg %p26
      %p33 = scmp.eq.s32.totalorder %s17, 1
      %p34 = por %p32, %p33
      %p35 = scmp.ne.s32.totalorder %s27, %s30
      %p36 = scmp.eq.s32.totalorder %s17, 0
      %p37 = por %p35, %p36
      %p38 = scmp.ne.s32.totalorder %s27, %s30
      %p39 = scmp.eq.s32.totalorder %s22, 1
      %p40 = por %p38, %p39
      %p41 = scmp.ne.s32.totalorder %s30, %s31
      %p42 = scmp.eq.s32.totalorder %s22, 0
      %p43 = por %p41, %p42
      %p44 = scmp.ne.s32.totalorder %s30, %s31
      %p45 = scmp.eq.s32.totalorder %s23, 1
      %p46 = por %p44, %p45
      %p48 = scmp.ne.s32.totalorder %s31, %s47
      %p49 = scmp.eq.s32.totalorder %s23, 0
      %p50 = por %p48, %p49
      %s52 = sadd.s32 %s51, 1
      %p55 = scmp.eq.s32.totalorder %s17, 1
      %p56 = scmp.ne.s32.totalorder %s51, %s53
      %p57 = scmp.eq.s32.totalorder %s17, 0
      %p58 = por %p56, %p57
      %p59 = scmp.ne.s32.totalorder %s51, %s53
      %p60 = scmp.eq.s32.totalorder %s22, 1
      %p61 = por %p59, %p60
      %p62 = scmp.ne.s32.totalorder %s53, %s54
      %p63 = scmp.eq.s32.totalorder %s22, 0
      %p64 = por %p62, %p63
      %p65 = scmp.ne.s32.totalorder %s53, %s54
      %p66 = scmp.eq.s32.totalorder %s23, 1
      %p67 = por %p65, %p66
      %p69 = scmp.ne.s32.totalorder %s54, %s68
      %p70 = scmp.eq.s32.totalorder %s23, 0
      %p71 = por %p69, %p70
      %s73 = sadd.s32 %s72, 1
      %p76 = scmp.eq.s32.totalorder %s17, 1
      %p77 = scmp.ne.s32.totalorder %s72, %s74
      %p78 = scmp.eq.s32.totalorder %s17, 0
      %p79 = por %p77, %p78
      %p80 = scmp.ne.s32.totalorder %s72, %s74
      %p81 = scmp.eq.s32.totalorder %s22, 1
      %p82 = por %p80, %p81
      %p83 = scmp.ne.s32.totalorder %s74, %s75
      %p84 = scmp.eq.s32.totalorder %s22, 0
      %p85 = por %p83, %p84
      %p86 = scmp.ne.s32.totalorder %s74, %s75
      %p87 = scmp.eq.s32.totalorder %s23, 1
      %p88 = por %p86, %p87
      %p90 = scmp.ne.s32.totalorder %s75, %s89
      %p91 = scmp.eq.s32.totalorder %s23, 0
      %p92 = por %p90, %p91
      %s94 = sadd.s32 %s93, 1
      %p97 = scmp.eq.s32.totalorder %s17, 1
      %p98 = scmp.ne.s32.totalorder %s93, %s95
      %p99 = scmp.eq.s32.totalorder %s17, 0
      %p100 = por %p98, %p99
      %p101 = scmp.ne.s32.totalorder %s93, %s95
      %p102 = scmp.eq.s32.totalorder %s22, 1
      %p103 = por %p101, %p102
      %p104 = scmp.ne.s32.totalorder %s95, %s96
      %p105 = scmp.eq.s32.totalorder %s22, 0
      %p106 = por %p104, %p105
      %p107 = scmp.ne.s32.totalorder %s95, %s96
      %p108 = scmp.eq.s32.totalorder %s23, 1
      %p109 = por %p107, %p108
      %p111 = scmp.ne.s32.totalorder %s96, %s110
      %p112 = scmp.eq.s32.totalorder %s23, 0
      %p113 = por %p111, %p112
      %s114 = ssub.s32 %s17, %s24
      %p115 = scmp.eq.s32.totalorder %s114, 0
      %s117 = sadd.s32 %s116, 1
      %s118 = scalar_select %p115, %s116, %s117
      %p121 = pneg %p115
      %p122 = scmp.eq.s32.totalorder %s17, 1
      %p123 = por %p121, %p122
      %p124 = scmp.ne.s32.totalorder %s116, %s119
      %p125 = scmp.eq.s32.totalorder %s17, 0
      %p126 = por %p124, %p125
      %p127 = scmp.ne.s32.totalorder %s116, %s119
      %p128 = scmp.eq.s32.totalorder %s22, 1
      %p129 = por %p127, %p128
      %p130 = scmp.ne.s32.totalorder %s119, %s120
      %p131 = scmp.eq.s32.totalorder %s22, 0
      %p132 = por %p130, %p131
      %p133 = scmp.ne.s32.totalorder %s119, %s120
      %p134 = scmp.eq.s32.totalorder %s23, 1
      %p135 = por %p133, %p134
      %p137 = scmp.ne.s32.totalorder %s120, %s136
      %p138 = scmp.eq.s32.totalorder %s23, 0
      %p139 = por %p137, %p138
      %p140 = scmp.le.s32.totalorder 1, %s17
      %p141 = scmp.lt.s32.totalorder %s17, 3
      %p142 = pnand %p140, %p141
      %p143 = pneg %p142
      // Predicated region
      $region9: #{tpu_custom_call.1} parent=5 // pred_check
        _
      $region10: #{tpu_custom_call.1} parent=5 // pred_check_branch
        %145 = sbr.rel (%p142) target = $region12
      $region11: #{tpu_custom_call.1} parent=5 // pred_region
        %s146 = ssub.s32 %s17, 1
        // Predicated region
        $region13: #{tpu_custom_call.1} parent=11 // pred_check
          %p147 = pneg %p64
        $region14: #{tpu_custom_call.1} parent=11 // pred_check_branch
          %149 = sbr.rel (%p147) target = $region16
        $region15: #{tpu_custom_call.1} parent=11 // pred_region
          _
        $region16: #{tpu_custom_call.1} parent=11 // pred_fallthru
          _
        // Predicated region
        $region17: #{tpu_custom_call.1} parent=11 // pred_check
          %p150 = pneg %p85
        $region18: #{tpu_custom_call.1} parent=11 // pred_check_branch
          %152 = sbr.rel (%p150) target = $region20
        $region19: #{tpu_custom_call.1} parent=11 // pred_region
          _
        $region20: #{tpu_custom_call.1} parent=11 // pred_fallthru
          _
        // Predicated region
        $region21: #{tpu_custom_call.1} parent=11 // pred_check
          %p153 = pneg %p106
        $region22: #{tpu_custom_call.1} parent=11 // pred_check_branch
          %155 = sbr.rel (%p153) target = $region24
        $region23: #{tpu_custom_call.1} parent=11 // pred_region
          %s157 = ssub.s32 8192, 8192
          %158 = vsyncadd [#allocation6], %s157
          %s159 = sshll.u32 [#allocation5], 4
          %s160 = int_to_ptr.vmem [resolvable:$true] %s159
          %165 = dma.hbm_to_vmem [thread:$0]  %s3, 8192, %s160, [#allocation6], 128, 128, 8
        $region24: #{tpu_custom_call.1} parent=11 // pred_fallthru
          _
      $region12: #{tpu_custom_call.1} parent=5 // pred_fallthru
        _
      %p166 = scmp.lt.s32.totalorder %s17, 2
      // Predicated region
      $region25: #{tpu_custom_call.1} parent=5 // pred_check
        %p167 = pneg %p166
      $region26: #{tpu_custom_call.1} parent=5 // pred_check_branch
        %169 = sbr.rel (%p167) target = $region28
      $region27: #{tpu_custom_call.1} parent=5 // pred_region
        // Predicated region
        $region29: #{tpu_custom_call.1} parent=27 // pred_check
          %p170 = pneg %p37
        $region30: #{tpu_custom_call.1} parent=27 // pred_check_branch
          %172 = sbr.rel (%p170) target = $region32
        $region31: #{tpu_custom_call.1} parent=27 // pred_region
          %s173 = sand.u32 %s27, 1
          %s174 = scalar_lea.sflag [#allocation3], %s173
          %s175 = sand.u32 %s27, 1
          %s176 = smul.addr %s175, 64
          %s177 = scalar_lea.vmem [#allocation2], %s176
          %s179 = ssub.s32 1024, 1024
          %180 = vsyncadd %s174, %s179
          %s181 = smul.addr %s17, 8
          %s182 = smul.addr %s181, 128
          %s183 = scalar_lea.hbm %s0, %s182
          %s184 = sshll.u32 %s177, 4
          %s185 = int_to_ptr.vmem [resolvable:$true] %s184
          %190 = dma.hbm_to_vmem [thread:$0]  %s183, 1024, %s185, %s174, 256, 256, 16
        $region32: #{tpu_custom_call.1} parent=27 // pred_fallthru
          _
      $region28: #{tpu_custom_call.1} parent=5 // pred_fallthru
        _
      %p191 = scmp.le.s32.totalorder 1, %s17
      %p192 = scmp.lt.s32.totalorder %s17, 3
      %p193 = pnand %p191, %p192
      %p194 = pneg %p193
      // Predicated region
      $region33: #{tpu_custom_call.1} parent=5 // pred_check
        _
      $region34: #{tpu_custom_call.1} parent=5 // pred_check_branch
        %196 = sbr.rel (%p193) target = $region36
      $region35: #{tpu_custom_call.1} parent=5 // pred_region
        %s197 = ssub.s32 %s17, 1
        %s198 = sand.u32 %s30, 1
        %s199 = scalar_lea.sflag [#allocation3], %s198
        %s200 = sand.u32 %s30, 1
        %s201 = smul.addr %s200, 64
        %s202 = scalar_lea.vmem [#allocation2], %s201
        // Predicated region
        $region37: #{tpu_custom_call.1} parent=35 // pred_check
          %p203 = pneg %p43
        $region38: #{tpu_custom_call.1} parent=35 // pred_check_branch
          %205 = sbr.rel (%p203) target = $region40
        $region39: #{tpu_custom_call.1} parent=35 // pred_region
          %206 = dma.done %s199, 1024
        $region40: #{tpu_custom_call.1} parent=35 // pred_fallthru
          _
        // Predicated region
        $region41: #{tpu_custom_call.1} parent=35 // pred_check
          %p207 = pneg %p106
        $region42: #{tpu_custom_call.1} parent=35 // pred_check_branch
          %209 = sbr.rel (%p207) target = $region44
        $region43: #{tpu_custom_call.1} parent=35 // pred_region
          %210 = dma.done [#allocation6], 8192
        $region44: #{tpu_custom_call.1} parent=35 // pred_fallthru
          _
        %s211 = sand.u32 %s30, 1
        %s212 = scalar_lea.sflag [#allocation3], %s211
        %s213 = sand.u32 %s30, 1
        %s214 = smul.addr %s213, 64
        %s215 = scalar_lea.vmem [#allocation2], %s214
        %p216 = pneg %p43
        %p217 = pneg %p40
        %p218 = pneg %p64
        %p219 = pneg %p61
        %p220 = pneg %p85
        %p221 = pneg %p82
        %p222 = pneg %p106
        %p223 = pneg %p103
        %p224 = pneg %p132
        %p225 = pneg %p129
        %s226 = sand.u32 %s119, 1
        %s227 = scalar_lea.sflag [#allocation4], %s226
        %s228 = sand.u32 %s119, 1
        %s229 = smul.addr %s228, 64
        %s230 = scalar_lea.vmem [#allocation7], %s229
        %v232 = vld [vmem:[%s202] sm:$0xff]
        %v233 = vld [vmem:[%s202 + $0x8] sm:$0xff]
        %v234 = vld [vmem:[%s202 + $0x10] sm:$0xff]
        %v235 = vld [vmem:[%s202 + $0x18] sm:$0xff]
        %v236 = vld [vmem:[%s202 + $0x20] sm:$0xff]
        %v237 = vld [vmem:[%s202 + $0x28] sm:$0xff]
        %v238 = vld [vmem:[%s202 + $0x30] sm:$0xff]
        %v239 = vld [vmem:[%s202 + $0x38] sm:$0xff]
        %v240 = vadd.f32 %v232, %v233
        %241 = vadd.xlane.f32.xlu0 %v240
        %v242 = vpop.xlane.xlu0 %241
        %v243 = vadd.f32 %v234, %v235
        %244 = vadd.xlane.f32.xlu0 %v243
        %v245 = vpop.xlane.xlu0 %244
        %v246 = vadd.f32 %v236, %v237
        %247 = vadd.xlane.f32.xlu0 %v246
        %v248 = vpop.xlane.xlu0 %247
        %v249 = vadd.f32 %v238, %v239
        %250 = vadd.xlane.f32.xlu0 %v249
        %v251 = vpop.xlane.xlu0 %250
        %v252 = vmul.f32 %v242, 0.00390625
        %v253 = vmul.f32 %v245, 0.00390625
        %v254 = vmul.f32 %v248, 0.00390625
        %v255 = vmul.f32 %v251, 0.00390625
        %v256 = vmax.f32 %v232, %v233
        %257 = vmax.xlane.f32.xlu0 %v256
        %v258 = vpop.xlane.xlu0 %257
        %v259 = vmax.f32 %v234, %v235
        %260 = vmax.xlane.f32.xlu0 %v259
        %v261 = vpop.xlane.xlu0 %260
        %v262 = vmax.f32 %v236, %v237
        %263 = vmax.xlane.f32.xlu0 %v262
        %v264 = vpop.xlane.xlu0 %263
        %v265 = vmax.f32 %v238, %v239
        %266 = vmax.xlane.f32.xlu0 %v265
        %v267 = vpop.xlane.xlu0 %266
        %v272 = vlaneseq
        %v273 = vand.u32 %v272, 127
        %v274 = vlaneseq
        %v275 = vshrl.u32 %v274, 7
        %v276 = vsub.s32 %v273, %v275
        %v277 = vrot.slane %v252, %v276
        %v278 = vadd.s32 %v273, 4294967288
        %v279 = vlaneseq
        %v280 = vshrl.u32 %v279, 7
        %v281 = vsub.s32 %v278, %v280
        %v282 = vrot.slane %v253, %v281
        %vm283 = vcmask 130112
        %v284 = vsel %vm283, %v282, %v277
        %v285 = vadd.s32 %v273, 4294967280
        %v286 = vlaneseq
        %v287 = vshrl.u32 %v286, 7
        %v288 = vsub.s32 %v285, %v287
        %v289 = vrot.slane %v254, %v288
        %vm290 = vcmask 195712
        %v291 = vsel %vm290, %v289, %v284
        %v292 = vadd.s32 %v273, 4294967272
        %v293 = vlaneseq
        %v294 = vshrl.u32 %v293, 7
        %v295 = vsub.s32 %v292, %v294
        %v296 = vrot.slane %v255, %v295
        %vm297 = vcmask 261312
        %v298 = vsel %vm297, %v296, %v291
        %v304 = vlaneseq
        %v305 = vshrl.u32 %v304, 7
        %v306 = vsub.s32 %v273, %v305
        %v307 = vrot.slane %v258, %v306
        %v308 = vlaneseq
        %v309 = vshrl.u32 %v308, 7
        %v310 = vsub.s32 %v278, %v309
        %v311 = vrot.slane %v261, %v310
        %v312 = vsel %vm283, %v311, %v307
        %v313 = vlaneseq
        %v314 = vshrl.u32 %v313, 7
        %v315 = vsub.s32 %v285, %v314
        %v316 = vrot.slane %v264, %v315
        %v317 = vsel %vm290, %v316, %v312
        %v318 = vlaneseq
        %v319 = vshrl.u32 %v318, 7
        %v320 = vsub.s32 %v292, %v319
        %v321 = vrot.slane %v267, %v320
        %v322 = vsel %vm297, %v321, %v317
        %vm324 = vcmask 1040384
        %v325 = vsel %vm324, %v298, %v322
        %v326 = vpack.c.bf16 %v325, %v325
        %v327 = vld [vmem:[%s1] sm:$0xf]
        %v328 = vld [vmem:[%s1 + $0x4] sm:$0xf]
        %v329 = vld [vmem:[%s1 + $0x8] sm:$0xf]
        %v330 = vld [vmem:[%s1 + $0xc] sm:$0xf]
        %v335 = vunpack.c.l.b16 %v327
        %v336 = vunpack.c.l.b16 %v328
        %v337 = vunpack.c.l.b16 %v329
        %v338 = vunpack.c.l.b16 %v330
        %v339 = vpack.c.b16 %v336, %v335
        %v340 = vpack.c.b16 %v338, %v337
        %vm343 = vcmask 261120
        %v345 = vsel %vm343, %v326, 0
        %347 = vmatprep.subr.bf16.mxu0 0
        %348 = vmatpush1.bf16.msra.mxu0 0
        %349 = vmatprep.subr.bf16.mxu0 0
        %350 = vmatpush1.bf16.msra.mxu0 0
        %351 = vmatprep.subr.bf16.mxu0 0
        %352 = vmatpush1.bf16.msra.mxu0 0
        %353 = vmatprep.subr.bf16.mxu0 0
        %354 = vmatpush1.bf16.msra.mxu0 0
        %355 = vmatprep.subr.bf16.mxu0 0
        %356 = vmatpush1.bf16.msra.mxu0 0
        %357 = vmatprep.subr.bf16.mxu0 0
        %358 = vmatpush1.bf16.msra.mxu0 0
        %359 = vmatprep.subr.bf16.mxu0 0
        %360 = vmatpush1.bf16.msra.mxu0 %v340
        %361 = vmatprep.subr.bf16.mxu0 0
        %362 = vmatpush1.bf16.msra.mxu0 %v339
        %363 = vmatprep.subr.bf16.mxu0 0
        %364 = vmatpush2.bf16.msra.mxu0 0
        %365 = vmatprep.subr.bf16.mxu0 0
        %366 = vmatpush2.bf16.msra.mxu0 0
        %367 = vmatprep.subr.bf16.mxu0 0
        %368 = vmatpush2.bf16.msra.mxu0 0
        %369 = vmatprep.subr.bf16.mxu0 0
        %370 = vmatpush2.bf16.msra.mxu0 0
        %371 = vmatprep.subr.bf16.mxu0 0
        %372 = vmatpush2.bf16.msra.mxu0 0
        %373 = vmatprep.subr.bf16.mxu0 0
        %374 = vmatpush2.bf16.msra.mxu0 0
        %375 = vmatprep.subr.bf16.mxu0 0
        %376 = vmatpush2.bf16.msra.mxu0 0
        %377 = vmatprep.subr.bf16.mxu0 0
        %378 = vmatpush2.bf16.msra.mxu0 0
        %379 = vmatprep.mubr.bf16.mxu0 0
        %380 = vmatmul.mubr.bf16.gmra.mxu0 %v345
        %v381 = vpop.f32.mrf.mxu0
        %v382 = vadd.f32 0.0, %v381
        %v383 = vpop.f32.mrf.mxu0
        %v384 = vpop.f32.mrf.mxu0
        %v385 = vpop.f32.mrf.mxu0
        %386 = vdwg.mxu0
        %v387 = vmax.f32 %v382, 0.0
        %v388 = vpack.c.bf16 %v387, %v387
        %v389 = vld [vmem:[%s2] sm:$0x1]
        %vm390 = vcmask 15360
        %v392 = vsel %vm390, %v388, 0
        %v395 = vsel %vm324, %v389, 0
        %397 = vmatprep.subr.bf16.mxu0 0
        %398 = vmatpush1.bf16.msra.mxu0 0
        %399 = vmatprep.subr.bf16.mxu0 0
        %400 = vmatpush1.bf16.msra.mxu0 0
        %401 = vmatprep.subr.bf16.mxu0 0
        %402 = vmatpush1.bf16.msra.mxu0 0
        %403 = vmatprep.subr.bf16.mxu0 0
        %404 = vmatpush1.bf16.msra.mxu0 0
        %405 = vmatprep.subr.bf16.mxu0 0
        %406 = vmatpush1.bf16.msra.mxu0 0
        %407 = vmatprep.subr.bf16.mxu0 0
        %408 = vmatpush1.bf16.msra.mxu0 0
        %409 = vmatprep.subr.bf16.mxu0 0
        %410 = vmatpush1.bf16.msra.mxu0 0
        %411 = vmatprep.subr.bf16.mxu0 0
        %412 = vmatpush1.bf16.msra.mxu0 %v395
        %413 = vmatprep.subr.bf16.mxu0 0
        %414 = vmatpush2.bf16.msra.mxu0 0
        %415 = vmatprep.subr.bf16.mxu0 0
        %416 = vmatpush2.bf16.msra.mxu0 0
        %417 = vmatprep.subr.bf16.mxu0 0
        %418 = vmatpush2.bf16.msra.mxu0 0
        %419 = vmatprep.subr.bf16.mxu0 0
        %420 = vmatpush2.bf16.msra.mxu0 0
        %421 = vmatprep.subr.bf16.mxu0 0
        %422 = vmatpush2.bf16.msra.mxu0 0
        %423 = vmatprep.subr.bf16.mxu0 0
        %424 = vmatpush2.bf16.msra.mxu0 0
        %425 = vmatprep.subr.bf16.mxu0 0
        %426 = vmatpush2.bf16.msra.mxu0 0
        %427 = vmatprep.subr.bf16.mxu0 0
        %428 = vmatpush2.bf16.msra.mxu0 0
        %429 = vmatprep.mubr.bf16.mxu0 0
        %430 = vmatmul.mubr.bf16.gmra.mxu0 %v392
        %v431 = vpop.f32.mrf.mxu0
        %v432 = vadd.f32 0.0, %v431
        %v433 = vpop.f32.mrf.mxu0
        %v434 = vpop.f32.mrf.mxu0
        %v435 = vpop.f32.mrf.mxu0
        %436 = vdwg.mxu0
        %v438 = vrot.slane %v432, 1
        %v440 = vadd.f32 %v432, %v438
        %v441 = vxor.u32 %v440, 2147483648
        %v442 = vmul.f32 %v441, 1.442695
        %v443 = vpow.pop %v442
        %v444 = vadd.f32 %v443, 1.0
        %v445 = vrcp.pop %v444
        %v446 = vmul.f32 1.0, %v445
        %v447 = vlaneseq
        %v448 = vshrl.u32 %v447, 7
        %v449 = vsub.s32 0, %v448
        %v450 = vrot.slane %v446, %v449
        %452 = vbcast.lane.b32.xlu0 %v450, 256
        %v453 = vpop.permute.xlu0 %452
        %s455 = sor.u32 256, 8
        %456 = vbcast.lane.b32.xlu0 %v450, %s455
        %v457 = vpop.permute.xlu0 %456
        %s459 = sor.u32 256, 16
        %460 = vbcast.lane.b32.xlu0 %v450, %s459
        %v461 = vpop.permute.xlu0 %460
        %s463 = sor.u32 256, 24
        %464 = vbcast.lane.b32.xlu0 %v450, %s463
        %v465 = vpop.permute.xlu0 %464
        %v466 = vmul.f32 %v232, %v453
        %v467 = vmul.f32 %v233, %v453
        %v468 = vmul.f32 %v234, %v457
        %v469 = vmul.f32 %v235, %v457
        %v470 = vmul.f32 %v236, %v461
        %v471 = vmul.f32 %v237, %v461
        %v472 = vmul.f32 %v238, %v465
        %v473 = vmul.f32 %v239, %v465
        %v474 = vadd.f32 %v466, %v468
        %v475 = vadd.f32 %v474, %v470
        %v476 = vadd.f32 %v475, %v472
        %v477 = vrot.slane %v476, 4
        %v478 = vadd.f32 %v476, %v477
        %v479 = vrot.slane %v478, 2
        %v480 = vadd.f32 %v478, %v479
        %v481 = vrot.slane %v480, 1
        %v482 = vadd.f32 %v480, %v481
        %v483 = vadd.f32 %v467, %v469
        %v484 = vadd.f32 %v483, %v471
        %v485 = vadd.f32 %v484, %v473
        %v486 = vrot.slane %v485, 4
        %v487 = vadd.f32 %v485, %v486
        %v488 = vrot.slane %v487, 2
        %v489 = vadd.f32 %v487, %v488
        %v490 = vrot.slane %v489, 1
        %v491 = vadd.f32 %v489, %v490
        %v492 = vmul.f32 %v482, 0.03125
        %v493 = vmul.f32 %v491, 0.03125
        %v494 = vmax.f32 %v466, %v470
        %v495 = vmax.f32 %v468, %v472
        %v496 = vmax.f32 %v494, %v495
        %v497 = vrot.slane %v496, 4
        %v498 = vmax.f32 %v496, %v497
        %v499 = vrot.slane %v498, 2
        %v500 = vmax.f32 %v498, %v499
        %v501 = vrot.slane %v500, 1
        %v502 = vmax.f32 %v500, %v501
        %v503 = vmax.f32 %v467, %v471
        %v504 = vmax.f32 %v469, %v473
        %v505 = vmax.f32 %v503, %v504
        %v506 = vrot.slane %v505, 4
        %v507 = vmax.f32 %v505, %v506
        %v508 = vrot.slane %v507, 2
        %v509 = vmax.f32 %v507, %v508
        %v510 = vrot.slane %v509, 1
        %v511 = vmax.f32 %v509, %v510
        %v512 = vpack.c.bf16 %v492, %v492
        %v513 = vpack.c.bf16 %v493, %v493
        %v514 = vpack.c.bf16 %v502, %v502
        %v515 = vpack.c.bf16 %v511, %v511
        %v516 = vld [vmem:[#allocation5] sm:$0xff]
        %v517 = vld [vmem:[#allocation5 + $0x8] sm:$0xff]
        %v518 = vld [vmem:[#allocation5 + $0x10] sm:$0xff]
        %v519 = vld [vmem:[#allocation5 + $0x18] sm:$0xff]
        %v520 = vld [vmem:[#allocation5 + $0x20] sm:$0xff]
        %v521 = vld [vmem:[#allocation5 + $0x28] sm:$0xff]
        %v522 = vld [vmem:[#allocation5 + $0x30] sm:$0xff]
        %v523 = vld [vmem:[#allocation5 + $0x38] sm:$0xff]
        %v524 = vld [vmem:[#allocation5 + $0x40] sm:$0xff]
        %v525 = vld [vmem:[#allocation5 + $0x48] sm:$0xff]
        %v526 = vld [vmem:[#allocation5 + $0x50] sm:$0xff]
        %v527 = vld [vmem:[#allocation5 + $0x58] sm:$0xff]
        %v528 = vld [vmem:[#allocation5 + $0x60] sm:$0xff]
        %v529 = vld [vmem:[#allocation5 + $0x68] sm:$0xff]
        %v530 = vld [vmem:[#allocation5 + $0x70] sm:$0xff]
        %v531 = vld [vmem:[#allocation5 + $0x78] sm:$0xff]
        %v532 = vld [vmem:[#allocation5 + $0x80] sm:$0xff]
        %v533 = vld [vmem:[#allocation5 + $0x88] sm:$0xff]
        %v534 = vld [vmem:[#allocation5 + $0x90] sm:$0xff]
        %v535 = vld [vmem:[#allocation5 + $0x98] sm:$0xff]
        %v536 = vld [vmem:[#allocation5 + $0xa0] sm:$0xff]
        %v537 = vld [vmem:[#allocation5 + $0xa8] sm:$0xff]
        %v538 = vld [vmem:[#allocation5 + $0xb0] sm:$0xff]
        %v539 = vld [vmem:[#allocation5 + $0xb8] sm:$0xff]
        %v540 = vld [vmem:[#allocation5 + $0xc0] sm:$0xff]
        %v541 = vld [vmem:[#allocation5 + $0xc8] sm:$0xff]
        %v542 = vld [vmem:[#allocation5 + $0xd0] sm:$0xff]
        %v543 = vld [vmem:[#allocation5 + $0xd8] sm:$0xff]
        %v544 = vld [vmem:[#allocation5 + $0xe0] sm:$0xff]
        %v545 = vld [vmem:[#allocation5 + $0xe8] sm:$0xff]
        %v546 = vld [vmem:[#allocation5 + $0xf0] sm:$0xff]
        %v547 = vld [vmem:[#allocation5 + $0xf8] sm:$0xff]
        %v548 = vld [vmem:[#allocation5 + $0x100] sm:$0xff]
        %v549 = vld [vmem:[#allocation5 + $0x108] sm:$0xff]
        %v550 = vld [vmem:[#allocation5 + $0x110] sm:$0xff]
        %v551 = vld [vmem:[#allocation5 + $0x118] sm:$0xff]
        %v552 = vld [vmem:[#allocation5 + $0x120] sm:$0xff]
        %v553 = vld [vmem:[#allocation5 + $0x128] sm:$0xff]
        %v554 = vld [vmem:[#allocation5 + $0x130] sm:$0xff]
        %v555 = vld [vmem:[#allocation5 + $0x138] sm:$0xff]
        %v556 = vld [vmem:[#allocation5 + $0x140] sm:$0xff]
        %v557 = vld [vmem:[#allocation5 + $0x148] sm:$0xff]
        %v558 = vld [vmem:[#allocation5 + $0x150] sm:$0xff]
        %v559 = vld [vmem:[#allocation5 + $0x158] sm:$0xff]
        %v560 = vld [vmem:[#allocation5 + $0x160] sm:$0xff]
        %v561 = vld [vmem:[#allocation5 + $0x168] sm:$0xff]
        %v562 = vld [vmem:[#allocation5 + $0x170] sm:$0xff]
        %v563 = vld [vmem:[#allocation5 + $0x178] sm:$0xff]
        %v564 = vld [vmem:[#allocation5 + $0x180] sm:$0xff]
        %v565 = vld [vmem:[#allocation5 + $0x188] sm:$0xff]
        %v566 = vld [vmem:[#allocation5 + $0x190] sm:$0xff]
        %v567 = vld [vmem:[#allocation5 + $0x198] sm:$0xff]
        %v568 = vld [vmem:[#allocation5 + $0x1a0] sm:$0xff]
        %v569 = vld [vmem:[#allocation5 + $0x1a8] sm:$0xff]
        %v570 = vld [vmem:[#allocation5 + $0x1b0] sm:$0xff]
        %v571 = vld [vmem:[#allocation5 + $0x1b8] sm:$0xff]
        %v572 = vld [vmem:[#allocation5 + $0x1c0] sm:$0xff]
        %v573 = vld [vmem:[#allocation5 + $0x1c8] sm:$0xff]
        %v574 = vld [vmem:[#allocation5 + $0x1d0] sm:$0xff]
        %v575 = vld [vmem:[#allocation5 + $0x1d8] sm:$0xff]
        %v576 = vld [vmem:[#allocation5 + $0x1e0] sm:$0xff]
        %v577 = vld [vmem:[#allocation5 + $0x1e8] sm:$0xff]
        %v578 = vld [vmem:[#allocation5 + $0x1f0] sm:$0xff]
        %v579 = vld [vmem:[#allocation5 + $0x1f8] sm:$0xff]
        %v644 = vunpack.c.l.b16 %v516
        %v645 = vunpack.c.h.b16 %v516
        %v646 = vunpack.c.l.b16 %v517
        %v647 = vunpack.c.h.b16 %v517
        %v648 = vunpack.c.l.b16 %v518
        %v649 = vunpack.c.h.b16 %v518
        %v650 = vunpack.c.l.b16 %v519
        %v651 = vunpack.c.h.b16 %v519
        %v652 = vunpack.c.l.b16 %v520
        %v653 = vunpack.c.h.b16 %v520
        %v654 = vunpack.c.l.b16 %v521
        %v655 = vunpack.c.h.b16 %v521
        %v656 = vunpack.c.l.b16 %v522
        %v657 = vunpack.c.h.b16 %v522
        %v658 = vunpack.c.l.b16 %v523
        %v659 = vunpack.c.h.b16 %v523
        %v660 = vunpack.c.l.b16 %v524
        %v661 = vunpack.c.h.b16 %v524
        %v662 = vunpack.c.l.b16 %v525
        %v663 = vunpack.c.h.b16 %v525
        %v664 = vunpack.c.l.b16 %v526
        %v665 = vunpack.c.h.b16 %v526
        %v666 = vunpack.c.l.b16 %v527
        %v667 = vunpack.c.h.b16 %v527
        %v668 = vunpack.c.l.b16 %v528
        %v669 = vunpack.c.h.b16 %v528
        %v670 = vunpack.c.l.b16 %v529
        %v671 = vunpack.c.h.b16 %v529
        %v672 = vunpack.c.l.b16 %v530
        %v673 = vunpack.c.h.b16 %v530
        %v674 = vunpack.c.l.b16 %v531
        %v675 = vunpack.c.h.b16 %v531
        %v676 = vunpack.c.l.b16 %v532
        %v677 = vunpack.c.h.b16 %v532
        %v678 = vunpack.c.l.b16 %v533
        %v679 = vunpack.c.h.b16 %v533
        %v680 = vunpack.c.l.b16 %v534
        %v681 = vunpack.c.h.b16 %v534
        %v682 = vunpack.c.l.b16 %v535
        %v683 = vunpack.c.h.b16 %v535
        %v684 = vunpack.c.l.b16 %v536
        %v685 = vunpack.c.h.b16 %v536
        %v686 = vunpack.c.l.b16 %v537
        %v687 = vunpack.c.h.b16 %v537
        %v688 = vunpack.c.l.b16 %v538
        %v689 = vunpack.c.h.b16 %v538
        %v690 = vunpack.c.l.b16 %v539
        %v691 = vunpack.c.h.b16 %v539
        %v692 = vunpack.c.l.b16 %v540
        %v693 = vunpack.c.h.b16 %v540
        %v694 = vunpack.c.l.b16 %v541
        %v695 = vunpack.c.h.b16 %v541
        %v696 = vunpack.c.l.b16 %v542
        %v697 = vunpack.c.h.b16 %v542
        %v698 = vunpack.c.l.b16 %v543
        %v699 = vunpack.c.h.b16 %v543
        %v700 = vunpack.c.l.b16 %v544
        %v701 = vunpack.c.h.b16 %v544
        %v702 = vunpack.c.l.b16 %v545
        %v703 = vunpack.c.h.b16 %v545
        %v704 = vunpack.c.l.b16 %v546
        %v705 = vunpack.c.h.b16 %v546
        %v706 = vunpack.c.l.b16 %v547
        %v707 = vunpack.c.h.b16 %v547
        %v708 = vunpack.c.l.b16 %v548
        %v709 = vunpack.c.h.b16 %v548
        %v710 = vunpack.c.l.b16 %v549
        %v711 = vunpack.c.h.b16 %v549
        %v712 = vunpack.c.l.b16 %v550
        %v713 = vunpack.c.h.b16 %v550
        %v714 = vunpack.c.l.b16 %v551
        %v715 = vunpack.c.h.b16 %v551
        %v716 = vunpack.c.l.b16 %v552
        %v717 = vunpack.c.h.b16 %v552
        %v718 = vunpack.c.l.b16 %v553
        %v719 = vunpack.c.h.b16 %v553
        %v720 = vunpack.c.l.b16 %v554
        %v721 = vunpack.c.h.b16 %v554
        %v722 = vunpack.c.l.b16 %v555
        %v723 = vunpack.c.h.b16 %v555
        %v724 = vunpack.c.l.b16 %v556
        %v725 = vunpack.c.h.b16 %v556
        %v726 = vunpack.c.l.b16 %v557
        %v727 = vunpack.c.h.b16 %v557
        %v728 = vunpack.c.l.b16 %v558
        %v729 = vunpack.c.h.b16 %v558
        %v730 = vunpack.c.l.b16 %v559
        %v731 = vunpack.c.h.b16 %v559
        %v732 = vunpack.c.l.b16 %v560
        %v733 = vunpack.c.h.b16 %v560
        %v734 = vunpack.c.l.b16 %v561
        %v735 = vunpack.c.h.b16 %v561
        %v736 = vunpack.c.l.b16 %v562
        %v737 = vunpack.c.h.b16 %v562
        %v738 = vunpack.c.l.b16 %v563
        %v739 = vunpack.c.h.b16 %v563
        %v740 = vunpack.c.l.b16 %v564
        %v741 = vunpack.c.h.b16 %v564
        %v742 = vunpack.c.l.b16 %v565
        %v743 = vunpack.c.h.b16 %v565
        %v744 = vunpack.c.l.b16 %v566
        %v745 = vunpack.c.h.b16 %v566
        %v746 = vunpack.c.l.b16 %v567
        %v747 = vunpack.c.h.b16 %v567
        %v748 = vunpack.c.l.b16 %v568
        %v749 = vunpack.c.h.b16 %v568
        %v750 = vunpack.c.l.b16 %v569
        %v751 = vunpack.c.h.b16 %v569
        %v752 = vunpack.c.l.b16 %v570
        %v753 = vunpack.c.h.b16 %v570
        %v754 = vunpack.c.l.b16 %v571
        %v755 = vunpack.c.h.b16 %v571
        %v756 = vunpack.c.l.b16 %v572
        %v757 = vunpack.c.h.b16 %v572
        %v758 = vunpack.c.l.b16 %v573
        %v759 = vunpack.c.h.b16 %v573
        %v760 = vunpack.c.l.b16 %v574
        %v761 = vunpack.c.h.b16 %v574
        %v762 = vunpack.c.l.b16 %v575
        %v763 = vunpack.c.h.b16 %v575
        %v764 = vunpack.c.l.b16 %v576
        %v765 = vunpack.c.h.b16 %v576
        %v766 = vunpack.c.l.b16 %v577
        %v767 = vunpack.c.h.b16 %v577
        %v768 = vunpack.c.l.b16 %v578
        %v769 = vunpack.c.h.b16 %v578
        %v770 = vunpack.c.l.b16 %v579
        %v771 = vunpack.c.h.b16 %v579
        %v772 = vpack.c.b16 %v646, %v644
        %v773 = vpack.c.b16 %v647, %v645
        %v774 = vpack.c.b16 %v650, %v648
        %v775 = vpack.c.b16 %v651, %v649
        %v776 = vpack.c.b16 %v654, %v652
        %v777 = vpack.c.b16 %v655, %v653
        %v778 = vpack.c.b16 %v658, %v656
        %v779 = vpack.c.b16 %v659, %v657
        %v780 = vpack.c.b16 %v662, %v660
        %v781 = vpack.c.b16 %v663, %v661
        %v782 = vpack.c.b16 %v666, %v664
        %v783 = vpack.c.b16 %v667, %v665
        %v784 = vpack.c.b16 %v670, %v668
        %v785 = vpack.c.b16 %v671, %v669
        %v786 = vpack.c.b16 %v674, %v672
        %v787 = vpack.c.b16 %v675, %v673
        %v788 = vpack.c.b16 %v678, %v676
        %v789 = vpack.c.b16 %v679, %v677
        %v790 = vpack.c.b16 %v682, %v680
        %v791 = vpack.c.b16 %v683, %v681
        %v792 = vpack.c.b16 %v686, %v684
        %v793 = vpack.c.b16 %v687, %v685
        %v794 = vpack.c.b16 %v690, %v688
        %v795 = vpack.c.b16 %v691, %v689
        %v796 = vpack.c.b16 %v694, %v692
        %v797 = vpack.c.b16 %v695, %v693
        %v798 = vpack.c.b16 %v698, %v696
        %v799 = vpack.c.b16 %v699, %v697
        %v800 = vpack.c.b16 %v702, %v700
        %v801 = vpack.c.b16 %v703, %v701
        %v802 = vpack.c.b16 %v706, %v704
        %v803 = vpack.c.b16 %v707, %v705
        %v804 = vpack.c.b16 %v710, %v708
        %v805 = vpack.c.b16 %v711, %v709
        %v806 = vpack.c.b16 %v714, %v712
        %v807 = vpack.c.b16 %v715, %v713
        %v808 = vpack.c.b16 %v718, %v716
        %v809 = vpack.c.b16 %v719, %v717
        %v810 = vpack.c.b16 %v722, %v720
        %v811 = vpack.c.b16 %v723, %v721
        %v812 = vpack.c.b16 %v726, %v724
        %v813 = vpack.c.b16 %v727, %v725
        %v814 = vpack.c.b16 %v730, %v728
        %v815 = vpack.c.b16 %v731, %v729
        %v816 = vpack.c.b16 %v734, %v732
        %v817 = vpack.c.b16 %v735, %v733
        %v818 = vpack.c.b16 %v738, %v736
        %v819 = vpack.c.b16 %v739, %v737
        %v820 = vpack.c.b16 %v742, %v740
        %v821 = vpack.c.b16 %v743, %v741
        %v822 = vpack.c.b16 %v746, %v744
        %v823 = vpack.c.b16 %v747, %v745
        %v824 = vpack.c.b16 %v750, %v748
        %v825 = vpack.c.b16 %v751, %v749
        %v826 = vpack.c.b16 %v754, %v752
        %v827 = vpack.c.b16 %v755, %v753
        %v828 = vpack.c.b16 %v758, %v756
        %v829 = vpack.c.b16 %v759, %v757
        %v830 = vpack.c.b16 %v762, %v760
        %v831 = vpack.c.b16 %v763, %v761
        %v832 = vpack.c.b16 %v766, %v764
        %v833 = vpack.c.b16 %v767, %v765
        %v834 = vpack.c.b16 %v770, %v768
        %v835 = vpack.c.b16 %v771, %v769
        %900 = vmatprep.subr.bf16.mxu0 %v787
        %901 = vmatpush1.bf16.msra.mxu0 %v786
        %902 = vmatprep.subr.bf16.mxu0 %v785
        %903 = vmatpush1.bf16.msra.mxu0 %v784
        %904 = vmatprep.subr.bf16.mxu0 %v783
        %905 = vmatpush1.bf16.msra.mxu0 %v782
        %906 = vmatprep.subr.bf16.mxu0 %v781
        %907 = vmatpush1.bf16.msra.mxu0 %v780
        %908 = vmatprep.subr.bf16.mxu0 %v779
        %909 = vmatpush1.bf16.msra.mxu0 %v778
        %910 = vmatprep.subr.bf16.mxu0 %v777
        %911 = vmatpush1.bf16.msra.mxu0 %v776
        %912 = vmatprep.subr.bf16.mxu0 %v775
        %913 = vmatpush1.bf16.msra.mxu0 %v774
        %914 = vmatprep.subr.bf16.mxu0 %v773
        %915 = vmatpush1.bf16.msra.mxu0 %v772
        %916 = vmatprep.subr.bf16.mxu0 %v803
        %917 = vmatpush2.bf16.msra.mxu0 %v802
        %918 = vmatprep.subr.bf16.mxu0 %v801
        %919 = vmatpush2.bf16.msra.mxu0 %v800
        %920 = vmatprep.subr.bf16.mxu0 %v799
        %921 = vmatpush2.bf16.msra.mxu0 %v798
        %922 = vmatprep.subr.bf16.mxu0 %v797
        %923 = vmatpush2.bf16.msra.mxu0 %v796
        %924 = vmatprep.subr.bf16.mxu0 %v795
        %925 = vmatpush2.bf16.msra.mxu0 %v794
        %926 = vmatprep.subr.bf16.mxu0 %v793
        %927 = vmatpush2.bf16.msra.mxu0 %v792
        %928 = vmatprep.subr.bf16.mxu0 %v791
        %929 = vmatpush2.bf16.msra.mxu0 %v790
        %930 = vmatprep.subr.bf16.mxu0 %v789
        %931 = vmatpush2.bf16.msra.mxu0 %v788
        %932 = vmatprep.mubr.bf16.mxu0 %v513
        %933 = vmatmul.mubr.bf16.gmra.mxu0 %v512
        %v934 = vpop.f32.mrf.mxu0
        %v935 = vadd.f32 0.0, %v934
        %v936 = vpop.f32.mrf.mxu0
        %v937 = vadd.f32 0.0, %v936
        %v938 = vpop.f32.mrf.mxu0
        %v939 = vpop.f32.mrf.mxu0
        %940 = vdwg.mxu0
        %941 = vmatprep.subr.bf16.mxu0 %v819
        %942 = vmatpush1.bf16.msra.mxu0 %v818
        %943 = vmatprep.subr.bf16.mxu0 %v817
        %944 = vmatpush1.bf16.msra.mxu0 %v816
        %945 = vmatprep.subr.bf16.mxu0 %v815
        %946 = vmatpush1.bf16.msra.mxu0 %v814
        %947 = vmatprep.subr.bf16.mxu0 %v813
        %948 = vmatpush1.bf16.msra.mxu0 %v812
        %949 = vmatprep.subr.bf16.mxu0 %v811
        %950 = vmatpush1.bf16.msra.mxu0 %v810
        %951 = vmatprep.subr.bf16.mxu0 %v809
        %952 = vmatpush1.bf16.msra.mxu0 %v808
        %953 = vmatprep.subr.bf16.mxu0 %v807
        %954 = vmatpush1.bf16.msra.mxu0 %v806
        %955 = vmatprep.subr.bf16.mxu0 %v805
        %956 = vmatpush1.bf16.msra.mxu0 %v804
        %957 = vmatprep.subr.bf16.mxu0 %v835
        %958 = vmatpush2.bf16.msra.mxu0 %v834
        %959 = vmatprep.subr.bf16.mxu0 %v833
        %960 = vmatpush2.bf16.msra.mxu0 %v832
        %961 = vmatprep.subr.bf16.mxu0 %v831
        %962 = vmatpush2.bf16.msra.mxu0 %v830
        %963 = vmatprep.subr.bf16.mxu0 %v829
        %964 = vmatpush2.bf16.msra.mxu0 %v828
        %965 = vmatprep.subr.bf16.mxu0 %v827
        %966 = vmatpush2.bf16.msra.mxu0 %v826
        %967 = vmatprep.subr.bf16.mxu0 %v825
        %968 = vmatpush2.bf16.msra.mxu0 %v824
        %969 = vmatprep.subr.bf16.mxu0 %v823
        %970 = vmatpush2.bf16.msra.mxu0 %v822
        %971 = vmatprep.subr.bf16.mxu0 %v821
        %972 = vmatpush2.bf16.msra.mxu0 %v820
        %973 = vmatprep.mubr.bf16.mxu0 %v515
        %974 = vmatmul.mubr.bf16.gmra.mxu0 %v514
        %v975 = vpop.f32.mrf.mxu0
        %v976 = vadd.f32 %v935, %v975
        %v977 = vpop.f32.mrf.mxu0
        %v978 = vadd.f32 %v937, %v977
        %v979 = vpop.f32.mrf.mxu0
        %v980 = vpop.f32.mrf.mxu0
        %981 = vdwg.mxu0
        %v982 = vxor.u32 %v976, 2147483648
        %v983 = vxor.u32 %v978, 2147483648
        %v984 = vmul.f32 %v982, 1.442695
        %v985 = vpow.pop %v984
        %v986 = vmul.f32 %v983, 1.442695
        %v987 = vpow.pop %v986
        %v988 = vadd.f32 %v985, 1.0
        %v989 = vadd.f32 %v987, 1.0
        %v990 = vrcp.pop %v988
        %v991 = vmul.f32 1.0, %v990
        %v992 = vrcp.pop %v989
        %v993 = vmul.f32 1.0, %v992
        %v994 = vlaneseq
        %v995 = vshrl.u32 %v994, 7
        %v996 = vsub.s32 0, %v995
        %v997 = vrot.slane %v991, %v996
        %v998 = vlaneseq
        %v999 = vshrl.u32 %v998, 7
        %v1000 = vsub.s32 0, %v999
        %v1001 = vrot.slane %v993, %v1000
        %v1002 = vmul.f32 %v466, %v997
        %v1003 = vmul.f32 %v467, %v1001
        %v1004 = vmul.f32 %v468, %v997
        %v1005 = vmul.f32 %v469, %v1001
        %v1006 = vmul.f32 %v470, %v997
        %v1007 = vmul.f32 %v471, %v1001
        %v1008 = vmul.f32 %v472, %v997
        %v1009 = vmul.f32 %v473, %v1001
        %1010 = vst [vmem:[%s230] sm:$0xff] %v1002
        %1011 = vst [vmem:[%s230 + $0x8] sm:$0xff] %v1003
        %1012 = vst [vmem:[%s230 + $0x10] sm:$0xff] %v1004
        %1013 = vst [vmem:[%s230 + $0x18] sm:$0xff] %v1005
        %1014 = vst [vmem:[%s230 + $0x20] sm:$0xff] %v1006
        %1015 = vst [vmem:[%s230 + $0x28] sm:$0xff] %v1007
        %1016 = vst [vmem:[%s230 + $0x30] sm:$0xff] %v1008
        %1017 = vst [vmem:[%s230 + $0x38] sm:$0xff] %v1009
        %s1018 = sand.u32 %s119, 1
        %s1019 = scalar_lea.sflag [#allocation4], %s1018
        %s1020 = sand.u32 %s119, 1
        %s1021 = smul.addr %s1020, 64
        %s1022 = scalar_lea.vmem [#allocation7], %s1021
        // Predicated region
        $region45: #{tpu_custom_call.1} parent=35 // pred_check
          %p1023 = pneg %p129
        $region46: #{tpu_custom_call.1} parent=35 // pred_check_branch
          %1025 = sbr.rel (%p1023) target = $region48
        $region47: #{tpu_custom_call.1} parent=35 // pred_region
          %s1027 = ssub.s32 1024, 1024
          %1028 = vsyncadd %s1019, %s1027
          %s1029 = smul.addr %s22, 8
          %s1030 = smul.addr %s1029, 128
          %s1031 = scalar_lea.hbm %s4, %s1030
          %s1032 = sshll.u32 %s1022, 4
          %s1033 = int_to_ptr.vmem [resolvable:$true] %s1032
          %1038 = dma.vmem_to_hbm [thread:$0]  %s1033, 1024, %s1031, %s1019, 256, 256, 16
        $region48: #{tpu_custom_call.1} parent=35 // pred_fallthru
          _
      $region36: #{tpu_custom_call.1} parent=5 // pred_fallthru
        _
      %p1039 = scmp.le.s32.totalorder 2, %s17
      // Predicated region
      $region49: #{tpu_custom_call.1} parent=5 // pred_check
        %p1040 = pneg %p1039
      $region50: #{tpu_custom_call.1} parent=5 // pred_check_branch
        %1042 = sbr.rel (%p1040) target = $region52
      $region51: #{tpu_custom_call.1} parent=5 // pred_region
        %s1043 = ssub.s32 %s17, 2
        // Predicated region
        $region53: #{tpu_custom_call.1} parent=51 // pred_check
          %p1044 = pneg %p135
        $region54: #{tpu_custom_call.1} parent=51 // pred_check_branch
          %1046 = sbr.rel (%p1044) target = $region56
        $region55: #{tpu_custom_call.1} parent=51 // pred_region
          %s1047 = sand.u32 %s120, 1
          %s1048 = scalar_lea.sflag [#allocation4], %s1047
          %s1049 = sand.u32 %s120, 1
          %s1050 = smul.addr %s1049, 64
          %s1051 = scalar_lea.vmem [#allocation7], %s1050
          %1052 = dma.done %s1048, 1024
        $region56: #{tpu_custom_call.1} parent=51 // pred_fallthru
          _
      $region52: #{tpu_custom_call.1} parent=5 // pred_fallthru
        _
    $region6: #{tpu_custom_call.1} parent=1 // loop_footer
      %s21 = sadd.s32 1, %s17
    $region7: #{tpu_custom_call.1} parent=1 // loop_footer_branch
      %16 = sbr.rel target = $region3
    $region8: #{tpu_custom_call.1} parent=1 // loop_exit
      _
    %1053 = vsyncpa [#allocation3], 1
    %s1054 = scalar_lea.sflag [#allocation3], 1
    %1055 = vsyncpa %s1054, 1
    %1056 = vsyncpa [#allocation6], 1
    %1057 = vsyncpa [#allocation4], 1
    %s1058 = scalar_lea.sflag [#allocation4], 1
    %1059 = vsyncpa %s1058, 1

</llo_original>
